<compile_context>
chip_gen: v7x
topology: tpu7x:2x2x1
jax: 0.10.0
libtpu: 0.0.40
codegen_flags: <defaults>
</compile_context>

<pallas_src>
import functools

import numpy as np
import jax
import jax.numpy as jnp
from jax import lax
from jax.experimental import pallas as pl
from jax.experimental.pallas import tpu as pltpu


def _round_up(x, m):
    return (x + m - 1) // m * m


def _mmd_block_kernel(ri_ref, ci_ref, invbw_ref,          # scalar-prefetch (SMEM)
                      zr_ref, zc_ref, sqr_ref, sqc_ref,   # blocked inputs (VMEM)
                      out_ref,                             # (1, 8, 128) partials
                      *, nx, ny, tile, multipliers, use_bf16_gram):
    t = pl.program_id(0)
    ri = ri_ref[t]
    ci = ci_ref[t]
    n = nx + ny

    # ---- Gram block on the MXU, squared distances
    zr = zr_ref[...]                                   # (tile, Dp) f32
    zc = zc_ref[...]                                   # (tile, Dp) f32
    if use_bf16_gram:
        gram = lax.dot_general(zr.astype(jnp.bfloat16), zc.astype(jnp.bfloat16),
                               (((1,), (1,)), ((), ())),
                               preferred_element_type=jnp.float32)
    else:
        gram = lax.dot_general(zr, zc, (((1,), (1,)), ((), ())),
                               preferred_element_type=jnp.float32)
    d2 = sqr_ref[...] + sqc_ref[...] - 2.0 * gram      # (tile, tile)

    # ---- multi-bandwidth RBF kernel sum (1 exp + repeated squaring)
    inv_bw = invbw_ref[0]
    max_mult = max(multipliers)
    ratios = [max_mult / m for m in multipliers]       # static python floats
    if all(abs(r - round(r)) < 1e-6 for r in ratios):
        scale = inv_bw * (-1.0 / float(max_mult))      # traced scalar, < 0
        arg = jnp.minimum(d2 * scale, 0.0)             # folds the l2 >= 0 clamp
        e = jnp.exp(arg)
        k = None
        cur, cur_p = e, 1
        for p in sorted(int(round(r)) for r in ratios):
            while cur_p * 2 <= p:                      # square up
                cur = cur * cur
                cur_p *= 2
            while cur_p < p:                           # fill remaining gap
                cur = cur * e
                cur_p += 1
            k = cur if k is None else k + cur
    else:
        l2 = jnp.maximum(d2, 0.0)
        k = None
        for m in multipliers:
            term = jnp.exp(l2 * (inv_bw * (-1.0 / float(m))))
            k = term if k is None else k + term

    # ---- masked block sums (only (tile,1)/(1,tile) iotas; no wide iota masks)
    gi = lax.broadcasted_iota(jnp.int32, (tile, 1), 0) + ri * tile
    gj = lax.broadcasted_iota(jnp.int32, (1, tile), 1) + ci * tile
    row_x = (gi < nx).astype(jnp.float32)
    row_y = jnp.logical_and(gi >= nx, gi < n).astype(jnp.float32)
    col_x = (gj < nx).astype(jnp.float32)
    col_y = jnp.logical_and(gj >= nx, gj < n).astype(jnp.float32)

    r_x = jnp.sum(k * col_x, axis=1, keepdims=True)    # (tile, 1) cols in X
    r_y = jnp.sum(k * col_y, axis=1, keepdims=True)    # (tile, 1) cols in Y

    sxx = jnp.sum(r_x * row_x)                         # K[rows in X, cols in X]
    sxy = jnp.sum(r_y * row_x)                         # K[rows in X, cols in Y]
    syx = jnp.sum(r_x * row_y)                         # K[rows in Y, cols in X]
    syy = jnp.sum(r_y * row_y)                         # K[rows in Y, cols in Y]

    # Symmetry: off-diagonal tile blocks stand in for their mirror block too.
    is_diag = ri == ci
    w = jnp.where(is_diag, 1.0, 2.0)
    xx = w * sxx * (1.0 / float(nx * nx))
    yy = w * syy * (1.0 / float(ny * ny))
    xy = jnp.where(is_diag, sxy, sxy + syx) * (1.0 / float(nx * ny))

    cols = lax.broadcasted_iota(jnp.int32, (1, 8, 128), 2)
    out_ref[...] = (jnp.where(cols == 0, xx, 0.0)
                    + jnp.where(cols == 1, xy, 0.0)
                    + jnp.where(cols == 2, yy, 0.0))


def mmd_loss(X, Y, *, n_kernels=5, mul_factor=2.0, bandwidth=None,
             tile=256, use_bf16_gram=False):
    # RBF.__init__: bandwidth_multipliers = mul_factor ** (arange(n) - n // 2)
    multipliers = tuple(float(mul_factor) ** (i - n_kernels // 2)
                        for i in range(n_kernels))
    nx, ny = int(X.shape[0]), int(Y.shape[0])
    assert nx > 0 and ny > 0, "MMDLoss requires non-empty X and Y"
    n = nx + ny
    d = int(X.shape[1])
    assert int(Y.shape[1]) == d

    # TODO(synk): prefer tile=128 on v5e (128x128 MXU) via chip detection.
    if n <= tile:
        tile = _round_up(n, 8)
    n_pad = _round_up(n, tile)
    num_tiles = n_pad // tile
    dp = _round_up(d, 128)                              # lane-dense feature dim

    z = jnp.concatenate([X.astype(jnp.float32), Y.astype(jnp.float32)], axis=0)

    # ---- grid-invariant precompute (O(n*D)) done once in the wrapper
    sq = jnp.sum(z * z, axis=1)                         # (n,)
    if bandwidth is None:
        s2 = jnp.sum(sq)
        zsum = jnp.sum(z, axis=0)
        sum_l2 = 2.0 * float(n) * s2 - 2.0 * jnp.sum(zsum * zsum)
        bw = sum_l2 / float(n * n - n)
    else:
        bw = jnp.float32(bandwidth)
    inv_bw = (1.0 / bw).astype(jnp.float32).reshape((1,))

    z = jnp.pad(z, ((0, n_pad - n), (0, dp - d)))       # zero padding is masked out
    sq = jnp.pad(sq, (0, n_pad - n)).astype(jnp.float32)
    sq_rows = sq.reshape(n_pad, 1)                      # row-blocked per tile
    sq_cols = sq.reshape(1, n_pad)                      # col-blocked per tile

    # triangular enumeration of (row_tile, col_tile) blocks with col >= row
    ri_np, ci_np = np.triu_indices(num_tiles)
    ri = jnp.asarray(ri_np, dtype=jnp.int32)
    ci = jnp.asarray(ci_np, dtype=jnp.int32)
    num_blocks = int(ri_np.shape[0])

    kernel = functools.partial(_mmd_block_kernel, nx=nx, ny=ny, tile=tile,
                               multipliers=multipliers,
                               use_bf16_gram=use_bf16_gram)

    # generation-aware VMEM limit (<=~48 MiB on v7x, ~96 MiB on v5e/v6e)
    try:
        vmem_cap = int(pltpu.get_tpu_info().vmem_capacity_bytes)
    except Exception:
        vmem_cap = 64 * 1024 * 1024
    vmem_limit = min(vmem_cap * 3 // 4, 100 * 1024 * 1024)

    grid_spec = pltpu.PrefetchScalarGridSpec(
        num_scalar_prefetch=3,                          # row ids, col ids, 1/bw
        grid=(num_blocks,),
        in_specs=[
            pl.BlockSpec((tile, dp), lambda t, ri, ci, bw: (ri[t], 0)),   # Z row tile
            pl.BlockSpec((tile, dp), lambda t, ri, ci, bw: (ci[t], 0)),   # Z col tile
            pl.BlockSpec((tile, 1), lambda t, ri, ci, bw: (ri[t], 0)),    # ||z||^2 rows
            pl.BlockSpec((1, tile), lambda t, ri, ci, bw: (0, ci[t])),    # ||z||^2 cols
        ],
        out_specs=pl.BlockSpec((1, 8, 128), lambda t, ri, ci, bw: (t, 0, 0)),
    )

    parts = pl.pallas_call(
        kernel,
        out_shape=jax.ShapeDtypeStruct((num_blocks, 8, 128), jnp.float32),
        grid_spec=grid_spec,
        compiler_params=pltpu.CompilerParams(
            dimension_semantics=("parallel",),          # no carried state -> megacore OK
            vmem_limit_bytes=vmem_limit),
    )(ri, ci, inv_bw, z, z, sq_rows, sq_cols)

    # tiny final reduction of pre-scaled partials in the wrapper
    xx = jnp.sum(parts[:, 0, 0])
    xy = jnp.sum(parts[:, 0, 1])
    yy = jnp.sum(parts[:, 0, 2])
    return xx - 2.0 * xy + yy


def _mmd_loss_ref(X, Y, *, n_kernels=5, mul_factor=2.0):
    # pure-JAX reference mirroring the PyTorch module
    multipliers = mul_factor ** (jnp.arange(n_kernels) - n_kernels // 2)
    Z = jnp.vstack([X, Y]).astype(jnp.float32)
    diff = Z[:, None, :] - Z[None, :, :]
    l2 = jnp.sum(diff * diff, axis=-1)
    n = Z.shape[0]
    bw = jnp.sum(l2) / (n * n - n)
    K = jnp.sum(jnp.exp(-l2[None, ...] / (bw * multipliers)[:, None, None]), axis=0)
    nx = X.shape[0]
    xx = jnp.mean(K[:nx, :nx])
    xy = jnp.mean(K[:nx, nx:])
    yy = jnp.mean(K[nx:, nx:])
    return xx - 2.0 * xy + yy


if __name__ == "__main__":
    key = jax.random.PRNGKey(0)
    kx, ky = jax.random.split(key)
    N, M, D = 8, 8, 32
    X = jax.random.normal(kx, (N, D), dtype=jnp.float32)
    Y = 0.5 * jax.random.normal(ky, (M, D), dtype=jnp.float32) + 0.25

    loss = mmd_loss(X, Y)
    jax.block_until_ready(loss)

    ref = _mmd_loss_ref(X, Y)
    assert jnp.allclose(loss, ref, rtol=5e-3, atol=1e-5), (loss, ref)
    print("KERNEL_OK")
</pallas_src>

<mosaic_0001>
module attributes {stable_mosaic.version = 11 : i64} {
  func.func @_mmd_block_kernel(%arg0: i32, %arg1: memref<1xi32, #tpu.memory_space<smem>>, %arg2: memref<1xi32, #tpu.memory_space<smem>>, %arg3: memref<1xf32, #tpu.memory_space<smem>>, %arg4: memref<16x128xf32, #tpu.memory_space<vmem>>, %arg5: memref<16x128xf32, #tpu.memory_space<vmem>>, %arg6: memref<16x1xf32, #tpu.memory_space<vmem>>, %arg7: memref<1x16xf32, #tpu.memory_space<vmem>>, %arg8: memref<1x8x128xf32, #tpu.memory_space<vmem>>) attributes {dimension_semantics = [#tpu.dimension_semantics<parallel>], iteration_bounds = array<i64: 1>, scalar_prefetch = 3 : i64, scratch_operands = 0 : i64, tpu.core_type = #tpu.core_type<tc>, window_params = [{transform_indices = @transform_0, window_bounds = array<i64: 16, 128>}, {transform_indices = @transform_1, window_bounds = array<i64: 16, 128>}, {transform_indices = @transform_2, window_bounds = array<i64: 16, 1>}, {transform_indices = @transform_3, window_bounds = array<i64: 1, 16>}, {transform_indices = @transform_4, window_bounds = array<i64: 1, 8, 128>}]} {
    %0 = arith.index_cast %arg0 : i32 to index
    %1 = memref.load %arg1[%0] : memref<1xi32, #tpu.memory_space<smem>>
    %2 = arith.index_cast %arg0 : i32 to index
    %3 = memref.load %arg2[%2] : memref<1xi32, #tpu.memory_space<smem>>
    %c0 = arith.constant 0 : index
    %c0_0 = arith.constant 0 : index
    %4 = vector.load %arg4[%c0, %c0_0] : memref<16x128xf32, #tpu.memory_space<vmem>>, vector<16x128xf32>
    %c0_1 = arith.constant 0 : index
    %c0_2 = arith.constant 0 : index
    %5 = vector.load %arg5[%c0_1, %c0_2] : memref<16x128xf32, #tpu.memory_space<vmem>>, vector<16x128xf32>
    %cst = arith.constant dense<0.000000e+00> : vector<16x16xf32>
    %6 = tpu.matmul %4, %5, %cst {dimension_numbers = #tpu.dot_dimension_numbers<[1], [1], [0], [0], [0, 0, 1, 0], [], []>} : vector<16x128xf32>, vector<16x128xf32>, vector<16x16xf32> -> vector<16x16xf32>
    %c0_3 = arith.constant 0 : index
    %c0_4 = arith.constant 0 : index
    %7 = vector.load %arg6[%c0_3, %c0_4] : memref<16x1xf32, #tpu.memory_space<vmem>>, vector<16x1xf32>
    %c0_5 = arith.constant 0 : index
    %c0_6 = arith.constant 0 : index
    %8 = vector.load %arg7[%c0_5, %c0_6] : memref<1x16xf32, #tpu.memory_space<vmem>>, vector<1x16xf32>
    %9 = vector.broadcast %7 : vector<16x1xf32> to vector<16x16xf32>
    %10 = vector.broadcast %8 : vector<1x16xf32> to vector<16x16xf32>
    %11 = arith.addf %9, %10 : vector<16x16xf32>
    %cst_7 = arith.constant 2.000000e+00 : f32
    %12 = vector.broadcast %cst_7 : f32 to vector<16x16xf32>
    %13 = arith.mulf %12, %6 : vector<16x16xf32>
    %14 = arith.subf %11, %13 : vector<16x16xf32>
    %c0_8 = arith.constant 0 : index
    %15 = memref.load %arg3[%c0_8] : memref<1xf32, #tpu.memory_space<smem>>
    %cst_9 = arith.constant -2.500000e-01 : f32
    %16 = arith.mulf %15, %cst_9 : f32
    %17 = vector.broadcast %16 : f32 to vector<16x16xf32>
    %18 = arith.mulf %14, %17 : vector<16x16xf32>
    %cst_10 = arith.constant 0.000000e+00 : f32
    %19 = vector.broadcast %cst_10 : f32 to vector<16x16xf32>
    %20 = arith.minimumf %18, %19 : vector<16x16xf32>
    %21 = math.exp %20 : vector<16x16xf32>
    %22 = arith.mulf %21, %21 : vector<16x16xf32>
    %23 = arith.addf %21, %22 : vector<16x16xf32>
    %24 = arith.mulf %22, %22 : vector<16x16xf32>
    %25 = arith.addf %23, %24 : vector<16x16xf32>
    %26 = arith.mulf %24, %24 : vector<16x16xf32>
    %27 = arith.addf %25, %26 : vector<16x16xf32>
    %28 = arith.mulf %26, %26 : vector<16x16xf32>
    %29 = arith.addf %27, %28 : vector<16x16xf32>
    %30 = tpu.iota {dimensions = array<i32: 0>} : vector<16x1xi32>
    %c16_i32 = arith.constant 16 : i32
    %31 = arith.muli %1, %c16_i32 : i32
    %32 = vector.broadcast %31 : i32 to vector<16x1xi32>
    %33 = arith.addi %30, %32 : vector<16x1xi32>
    %34 = tpu.iota {dimensions = array<i32: 1>} : vector<1x16xi32>
    %c16_i32_11 = arith.constant 16 : i32
    %35 = arith.muli %3, %c16_i32_11 : i32
    %36 = vector.broadcast %35 : i32 to vector<1x16xi32>
    %37 = arith.addi %34, %36 : vector<1x16xi32>
    %c8_i32 = arith.constant 8 : i32
    %38 = vector.broadcast %c8_i32 : i32 to vector<16x1xi32>
    %39 = arith.cmpi slt, %33, %38 : vector<16x1xi32>
    %40 = arith.extui %39 : vector<16x1xi1> to vector<16x1xi32>
    %41 = arith.sitofp %40 : vector<16x1xi32> to vector<16x1xf32>
    %c8_i32_12 = arith.constant 8 : i32
    %42 = vector.broadcast %c8_i32_12 : i32 to vector<16x1xi32>
    %43 = arith.cmpi sge, %33, %42 : vector<16x1xi32>
    %c16_i32_13 = arith.constant 16 : i32
    %44 = vector.broadcast %c16_i32_13 : i32 to vector<16x1xi32>
    %45 = arith.cmpi slt, %33, %44 : vector<16x1xi32>
    %46 = arith.andi %43, %45 : vector<16x1xi1>
    %47 = arith.extui %46 : vector<16x1xi1> to vector<16x1xi32>
    %48 = arith.sitofp %47 : vector<16x1xi32> to vector<16x1xf32>
    %c8_i32_14 = arith.constant 8 : i32
    %49 = vector.broadcast %c8_i32_14 : i32 to vector<1x16xi32>
    %50 = arith.cmpi slt, %37, %49 : vector<1x16xi32>
    %51 = arith.extui %50 : vector<1x16xi1> to vector<1x16xi32>
    %52 = arith.sitofp %51 : vector<1x16xi32> to vector<1x16xf32>
    %c8_i32_15 = arith.constant 8 : i32
    %53 = vector.broadcast %c8_i32_15 : i32 to vector<1x16xi32>
    %54 = arith.cmpi sge, %37, %53 : vector<1x16xi32>
    %c16_i32_16 = arith.constant 16 : i32
    %55 = vector.broadcast %c16_i32_16 : i32 to vector<1x16xi32>
    %56 = arith.cmpi slt, %37, %55 : vector<1x16xi32>
    %57 = arith.andi %54, %56 : vector<1x16xi1>
    %58 = arith.extui %57 : vector<1x16xi1> to vector<1x16xi32>
    %59 = arith.sitofp %58 : vector<1x16xi32> to vector<1x16xf32>
    %60 = vector.broadcast %52 : vector<1x16xf32> to vector<16x16xf32>
    %61 = arith.mulf %29, %60 : vector<16x16xf32>
    %cst_17 = arith.constant dense<0.000000e+00> : vector<16xf32>
    %62 = vector.multi_reduction <add>, %61, %cst_17 [1] : vector<16x16xf32> to vector<16xf32>
    %63 = vector.shape_cast %62 : vector<16xf32> to vector<16x1xf32>
    %64 = vector.broadcast %59 : vector<1x16xf32> to vector<16x16xf32>
    %65 = arith.mulf %29, %64 : vector<16x16xf32>
    %cst_18 = arith.constant dense<0.000000e+00> : vector<16xf32>
    %66 = vector.multi_reduction <add>, %65, %cst_18 [1] : vector<16x16xf32> to vector<16xf32>
    %67 = vector.shape_cast %66 : vector<16xf32> to vector<16x1xf32>
    %68 = arith.mulf %63, %41 : vector<16x1xf32>
    %69 = vector.shape_cast %68 : vector<16x1xf32> to vector<1x16x1xf32>
    %cst_19 = arith.constant dense<0.000000e+00> : vector<1xf32>
    %70 = vector.multi_reduction <add>, %69, %cst_19 [1, 2] : vector<1x16x1xf32> to vector<1xf32>
    %71 = vector.shape_cast %70 : vector<1xf32> to vector<1x1x1xf32>
    %72 = vector.extract %71[0, 0, 0] : f32 from vector<1x1x1xf32>
    %73 = arith.mulf %67, %41 : vector<16x1xf32>
    %74 = vector.shape_cast %73 : vector<16x1xf32> to vector<1x16x1xf32>
    %cst_20 = arith.constant dense<0.000000e+00> : vector<1xf32>
    %75 = vector.multi_reduction <add>, %74, %cst_20 [1, 2] : vector<1x16x1xf32> to vector<1xf32>
    %76 = vector.shape_cast %75 : vector<1xf32> to vector<1x1x1xf32>
    %77 = vector.extract %76[0, 0, 0] : f32 from vector<1x1x1xf32>
    %78 = arith.mulf %63, %48 : vector<16x1xf32>
    %79 = vector.shape_cast %78 : vector<16x1xf32> to vector<1x16x1xf32>
    %cst_21 = arith.constant dense<0.000000e+00> : vector<1xf32>
    %80 = vector.multi_reduction <add>, %79, %cst_21 [1, 2] : vector<1x16x1xf32> to vector<1xf32>
    %81 = vector.shape_cast %80 : vector<1xf32> to vector<1x1x1xf32>
    %82 = vector.extract %81[0, 0, 0] : f32 from vector<1x1x1xf32>
    %83 = arith.mulf %67, %48 : vector<16x1xf32>
    %84 = vector.shape_cast %83 : vector<16x1xf32> to vector<1x16x1xf32>
    %cst_22 = arith.constant dense<0.000000e+00> : vector<1xf32>
    %85 = vector.multi_reduction <add>, %84, %cst_22 [1, 2] : vector<1x16x1xf32> to vector<1xf32>
    %86 = vector.shape_cast %85 : vector<1xf32> to vector<1x1x1xf32>
    %87 = vector.extract %86[0, 0, 0] : f32 from vector<1x1x1xf32>
    %88 = arith.cmpi eq, %1, %3 : i32
    %cst_23 = arith.constant 1.000000e+00 : f32
    %cst_24 = arith.constant 2.000000e+00 : f32
    %89 = arith.select %88, %cst_23, %cst_24 : f32
    %90 = arith.mulf %89, %72 : f32
    %cst_25 = arith.constant 1.562500e-02 : f32
    %91 = arith.mulf %90, %cst_25 : f32
    %92 = arith.mulf %89, %87 : f32
    %cst_26 = arith.constant 1.562500e-02 : f32
    %93 = arith.mulf %92, %cst_26 : f32
    %94 = arith.addf %77, %82 : f32
    %95 = arith.select %88, %77, %94 : f32
    %cst_27 = arith.constant 1.562500e-02 : f32
    %96 = arith.mulf %95, %cst_27 : f32
    %97 = tpu.iota {dimensions = array<i32: 2>} : vector<1x8x128xi32>
    %c0_i32 = arith.constant 0 : i32
    %98 = vector.broadcast %c0_i32 : i32 to vector<1x8x128xi32>
    %99 = arith.cmpi eq, %97, %98 : vector<1x8x128xi32>
    %cst_28 = arith.constant 0.000000e+00 : f32
    %100 = vector.broadcast %91 : f32 to vector<1x8x128xf32>
    %101 = vector.broadcast %cst_28 : f32 to vector<1x8x128xf32>
    %102 = arith.select %99, %100, %101 : vector<1x8x128xi1>, vector<1x8x128xf32>
    %c1_i32 = arith.constant 1 : i32
    %103 = vector.broadcast %c1_i32 : i32 to vector<1x8x128xi32>
    %104 = arith.cmpi eq, %97, %103 : vector<1x8x128xi32>
    %cst_29 = arith.constant 0.000000e+00 : f32
    %105 = vector.broadcast %96 : f32 to vector<1x8x128xf32>
    %106 = vector.broadcast %cst_29 : f32 to vector<1x8x128xf32>
    %107 = arith.select %104, %105, %106 : vector<1x8x128xi1>, vector<1x8x128xf32>
    %108 = arith.addf %102, %107 : vector<1x8x128xf32>
    %c2_i32 = arith.constant 2 : i32
    %109 = vector.broadcast %c2_i32 : i32 to vector<1x8x128xi32>
    %110 = arith.cmpi eq, %97, %109 : vector<1x8x128xi32>
    %cst_30 = arith.constant 0.000000e+00 : f32
    %111 = vector.broadcast %93 : f32 to vector<1x8x128xf32>
    %112 = vector.broadcast %cst_30 : f32 to vector<1x8x128xf32>
    %113 = arith.select %110, %111, %112 : vector<1x8x128xi1>, vector<1x8x128xf32>
    %114 = arith.addf %108, %113 : vector<1x8x128xf32>
    %c0_31 = arith.constant 0 : index
    %c0_32 = arith.constant 0 : index
    %c0_33 = arith.constant 0 : index
    %115 = vector.load %arg8[%c0_31, %c0_32, %c0_33] : memref<1x8x128xf32, #tpu.memory_space<vmem>>, vector<1x8x128xf32>
    tpu.vector_store %arg8[%c0_31, %c0_32, %c0_33], %114 {strides = array<i32>} : memref<1x8x128xf32, #tpu.memory_space<vmem>>, vector<1x8x128xf32>,
    return
  }
  func.func @transform_0(%arg0: i32, %arg1: memref<1xi32, #tpu.memory_space<smem>>, %arg2: memref<1xi32, #tpu.memory_space<smem>>, %arg3: memref<1xf32, #tpu.memory_space<smem>>) -> (i32, i32) {
    %0 = arith.index_cast %arg0 : i32 to index
    %1 = memref.load %arg1[%0] : memref<1xi32, #tpu.memory_space<smem>>
    %c0_i32 = arith.constant 0 : i32
    %c0_i32_0 = arith.constant 0 : i32
    return %1, %c0_i32 : i32, i32
  }
  func.func @transform_1(%arg0: i32, %arg1: memref<1xi32, #tpu.memory_space<smem>>, %arg2: memref<1xi32, #tpu.memory_space<smem>>, %arg3: memref<1xf32, #tpu.memory_space<smem>>) -> (i32, i32) {
    %0 = arith.index_cast %arg0 : i32 to index
    %1 = memref.load %arg2[%0] : memref<1xi32, #tpu.memory_space<smem>>
    %c0_i32 = arith.constant 0 : i32
    %c0_i32_0 = arith.constant 0 : i32
    return %1, %c0_i32 : i32, i32
  }
  func.func @transform_2(%arg0: i32, %arg1: memref<1xi32, #tpu.memory_space<smem>>, %arg2: memref<1xi32, #tpu.memory_space<smem>>, %arg3: memref<1xf32, #tpu.memory_space<smem>>) -> (i32, i32) {
    %0 = arith.index_cast %arg0 : i32 to index
    %1 = memref.load %arg1[%0] : memref<1xi32, #tpu.memory_space<smem>>
    %c0_i32 = arith.constant 0 : i32
    %c0_i32_0 = arith.constant 0 : i32
    return %1, %c0_i32 : i32, i32
  }
  func.func @transform_3(%arg0: i32, %arg1: memref<1xi32, #tpu.memory_space<smem>>, %arg2: memref<1xi32, #tpu.memory_space<smem>>, %arg3: memref<1xf32, #tpu.memory_space<smem>>) -> (i32, i32) {
    %0 = arith.index_cast %arg0 : i32 to index
    %1 = memref.load %arg2[%0] : memref<1xi32, #tpu.memory_space<smem>>
    %c0_i32 = arith.constant 0 : i32
    %c0_i32_0 = arith.constant 0 : i32
    return %c0_i32, %1 : i32, i32
  }
  func.func @transform_4(%arg0: i32, %arg1: memref<1xi32, #tpu.memory_space<smem>>, %arg2: memref<1xi32, #tpu.memory_space<smem>>, %arg3: memref<1xf32, #tpu.memory_space<smem>>) -> (i32, i32, i32) {
    %c0_i32 = arith.constant 0 : i32
    %c0_i32_0 = arith.constant 0 : i32
    %c0_i32_1 = arith.constant 0 : i32
    return %arg0, %c0_i32, %c0_i32_0 : i32, i32, i32
  }
}

</mosaic_0001>

<llo_original>
// kernel: tpu_custom_call.1
$region0: #{tpu_custom_call.1}
  #allocation0 [shape = 'u32[]', space=smem, size = 0x4, offset = 0x4, fixed_abs, tag = 'smem constant byte address 0x4 - core index']
  #allocation1 [shape = 'u32[144,128]{1,0:T(1,128)}', space=vmem, size = 0x12000, scoped, tag = 'internal scratch']
  #allocation2 [shape = 's32[1]{0}', space=sflag, size = 0x4, scoped, tag = 'scoped memory for tpu_custom_call.1']
  #allocation3 [shape = 's32[1]{0:T(128)S(6)}', space=smem, size = 0x200, scoped, tag = 'prefetched SMEM operand 0']
  #allocation4 [shape = 's32[1]{0:T(128)S(6)}', space=smem, size = 0x200, scoped, tag = 'prefetched SMEM operand 1']
  #allocation5 [shape = 'f32[1]{0:T(128)S(6)}', space=smem, size = 0x200, scoped, tag = 'prefetched SMEM operand 2']
  %s0 = inlined_call_operand.<no memory space> [shape: s32[1], index: 0, kind: input, shape index: {}]
  %s1 = inlined_call_operand.<no memory space> [shape: s32[1], index: 1, kind: input, shape index: {}]
  %s2 = inlined_call_operand.<no memory space> [shape: f32[1], index: 2, kind: input, shape index: {}]
  %s3 = inlined_call_operand.vmem [shape: f32[16,128], index: 3, kind: input, shape index: {}]
  %s4 = inlined_call_operand.vmem [shape: f32[16,128], index: 4, kind: input, shape index: {}]
  %s5 = inlined_call_operand.vmem [shape: f32[16,1], index: 5, kind: input, shape index: {}]
  %s6 = inlined_call_operand.vmem [shape: f32[1,16], index: 6, kind: input, shape index: {}]
  %s7 = inlined_call_operand.hbm [shape: f32[1,8,128], index: 7, kind: output, shape index: {}]
  %s8 = sld [smem:[#allocation0]]
  $region26: #{tpu_custom_call.1} parent=0
    _
  %s10 = ssub.s32 1, %s8
  %s11 = scalar_select 0, %s10, %s8
  %12 = sst [smem:[#allocation3]] %s0
  %13 = sst [smem:[#allocation4]] %s1
  %14 = sst [smem:[#allocation5]] %s2
  $region1: #{tpu_custom_call.1} parent=0
    #allocation6 [shape = 'u8[4096]{0}', space=vmem, size = 0x1000, scoped, tag = 'output window, operand 0, single buffered']
    #allocation7 [shape = 's32[1]{0}', space=sflag, size = 0x4, scoped, tag = 'scoped memory for tpu_custom_call.1']
    %15 = vsyncpa [#allocation7], 0
    // Predicated region
    $region2: #{tpu_custom_call.1} parent=1 // pred_check
      _
    $region3: #{tpu_custom_call.1} parent=1 // pred_check_branch
      %17 = sbr.rel (0) target = $region5
    $region4: #{tpu_custom_call.1} parent=1 // pred_region
      %s18 = sld [smem:[#allocation3]]
      %s19 = smul.u32 2, %s18
      %p20 = scmp.lt.s32.totalorder %s19, 1
      %s21 = scalar_select %p20, %s19, 1
      %s22 = smul.addr %s21, 8
      %s23 = scalar_lea.vmem %s3, %s22
      %s24 = sld [smem:[#allocation3]]
      %s25 = smul.u32 2, %s24
    $region5: #{tpu_custom_call.1} parent=1 // pred_fallthru
      _
    // Predicated region
    $region6: #{tpu_custom_call.1} parent=1 // pred_check
      _
    $region7: #{tpu_custom_call.1} parent=1 // pred_check_branch
      %27 = sbr.rel (0) target = $region9
    $region8: #{tpu_custom_call.1} parent=1 // pred_region
      %s28 = sld [smem:[#allocation4]]
      %s29 = smul.u32 2, %s28
      %p30 = scmp.lt.s32.totalorder %s29, 1
      %s31 = scalar_select %p30, %s29, 1
      %s32 = smul.addr %s31, 8
      %s33 = scalar_lea.vmem %s4, %s32
      %s34 = sld [smem:[#allocation4]]
      %s35 = smul.u32 2, %s34
    $region9: #{tpu_custom_call.1} parent=1 // pred_fallthru
      _
    // Predicated region
    $region10: #{tpu_custom_call.1} parent=1 // pred_check
      _
    $region11: #{tpu_custom_call.1} parent=1 // pred_check_branch
      %37 = sbr.rel (0) target = $region13
    $region12: #{tpu_custom_call.1} parent=1 // pred_region
      %s38 = sld [smem:[#allocation3]]
      %s39 = smul.u32 2, %s38
      %p40 = scmp.lt.s32.totalorder %s39, 1
      %s41 = scalar_select %p40, %s39, 1
      %s42 = smul.addr %s41, 8
      %s43 = scalar_lea.vmem %s5, %s42
      %s44 = sld [smem:[#allocation3]]
      %s45 = smul.u32 2, %s44
    $region13: #{tpu_custom_call.1} parent=1 // pred_fallthru
      _
    // Predicated region
    $region14: #{tpu_custom_call.1} parent=1 // pred_check
      _
    $region15: #{tpu_custom_call.1} parent=1 // pred_check_branch
      %47 = sbr.rel (0) target = $region17
    $region16: #{tpu_custom_call.1} parent=1 // pred_region
      %s48 = sld [smem:[#allocation4]]
      %p49 = scmp.lt.s32.totalorder %s48, 0
      %s50 = scalar_select %p49, %s48, 0
      %s51 = scalar_lea.vmem %s6, %s50
      %s52 = sld [smem:[#allocation4]]
    $region17: #{tpu_custom_call.1} parent=1 // pred_fallthru
      _
    %s53 = sld [smem:[#allocation3]]
    %s54 = smul.u32 2, %s53
    %p55 = scmp.lt.s32.totalorder %s54, 1
    %s56 = scalar_select %p55, %s54, 1
    %s57 = smul.addr %s56, 8
    %s58 = scalar_lea.vmem %s3, %s57
    %s59 = sld [smem:[#allocation4]]
    %s60 = smul.u32 2, %s59
    %p61 = scmp.lt.s32.totalorder %s60, 1
    %s62 = scalar_select %p61, %s60, 1
    %s63 = smul.addr %s62, 8
    %s64 = scalar_lea.vmem %s4, %s63
    %s65 = sld [smem:[#allocation3]]
    %s66 = smul.u32 2, %s65
    %p67 = scmp.lt.s32.totalorder %s66, 1
    %s68 = scalar_select %p67, %s66, 1
    %s69 = smul.addr %s68, 8
    %s70 = scalar_lea.vmem %s5, %s69
    %s71 = sld [smem:[#allocation4]]
    %p72 = scmp.lt.s32.totalorder %s71, 0
    %s73 = scalar_select %p72, %s71, 0
    %s74 = scalar_lea.vmem %s6, %s73
    %s75 = sld [smem:[#allocation3]]
    %s76 = smul.u32 2, %s75
    %p77 = scmp.lt.s32.totalorder %s76, 1
    %s78 = scalar_select %p77, %s76, 1
    %s79 = smul.addr %s78, 8
    %s80 = scalar_lea.vmem %s3, %s79
    %s81 = sld [smem:[#allocation3]]
    %s82 = smul.u32 2, %s81
    %s83 = sld [smem:[#allocation4]]
    %s84 = smul.u32 2, %s83
    %p85 = scmp.lt.s32.totalorder %s84, 1
    %s86 = scalar_select %p85, %s84, 1
    %s87 = smul.addr %s86, 8
    %s88 = scalar_lea.vmem %s4, %s87
    %s89 = sld [smem:[#allocation4]]
    %s90 = smul.u32 2, %s89
    %s91 = sld [smem:[#allocation3]]
    %s92 = smul.u32 2, %s91
    %p93 = scmp.lt.s32.totalorder %s92, 1
    %s94 = scalar_select %p93, %s92, 1
    %s95 = smul.addr %s94, 8
    %s96 = scalar_lea.vmem %s5, %s95
    %s97 = sld [smem:[#allocation3]]
    %s98 = smul.u32 2, %s97
    %s99 = sld [smem:[#allocation4]]
    %p100 = scmp.lt.s32.totalorder %s99, 0
    %s101 = scalar_select %p100, %s99, 0
    %s102 = scalar_lea.vmem %s6, %s101
    %s103 = sld [smem:[#allocation4]]
    %s104 = sld [smem:[#allocation3]]
    %s105 = sld [smem:[#allocation4]]
    %v106 = vld [vmem:[%s80] sm:$0xff]
    %v107 = vld [vmem:[%s80 + $0x8] sm:$0xff]
    %v108 = vld [vmem:[%s88] sm:$0xff]
    %v109 = vld [vmem:[%s88 + $0x8] sm:$0xff]
    %110 = vmatprep.subr.mxu0 0.0
    %111 = vmatpush1.xpose.msra.mxu0 %v108
    %112 = vmatprep.subr.mxu0 0.0
    %113 = vmatpush1.xpose.msra.mxu0 %v109
    %114 = vmatprep.subr.mxu0 0.0
    %115 = vmatpush1.xpose.msra.mxu0 0.0
    %116 = vmatprep.subr.mxu0 0.0
    %117 = vmatpush1.xpose.msra.mxu0 0.0
    %118 = vmatprep.subr.mxu0 0.0
    %119 = vmatpush1.xpose.msra.mxu0 0.0
    %120 = vmatprep.subr.mxu0 0.0
    %121 = vmatpush1.xpose.msra.mxu0 0.0
    %122 = vmatprep.subr.mxu0 0.0
    %123 = vmatpush1.xpose.msra.mxu0 0.0
    %124 = vmatprep.subr.mxu0 0.0
    %125 = vmatpush1.xpose.msra.mxu0 0.0
    %126 = vmatprep.subr.mxu0 0.0
    %127 = vmatpush1.xpose.msra.mxu0 0.0
    %128 = vmatprep.subr.mxu0 0.0
    %129 = vmatpush1.xpose.msra.mxu0 0.0
    %130 = vmatprep.subr.mxu0 0.0
    %131 = vmatpush1.xpose.msra.mxu0 0.0
    %132 = vmatprep.subr.mxu0 0.0
    %133 = vmatpush1.xpose.msra.mxu0 0.0
    %134 = vmatprep.subr.mxu0 0.0
    %135 = vmatpush1.xpose.msra.mxu0 0.0
    %136 = vmatprep.subr.mxu0 0.0
    %137 = vmatpush1.xpose.msra.mxu0 0.0
    %138 = vmatprep.subr.mxu0 0.0
    %139 = vmatpush1.xpose.msra.mxu0 0.0
    %140 = vmatprep.subr.mxu0 0.0
    %141 = vmatpush1.xpose.msra.mxu0 0.0
    %142 = vmatprep.subr.mxu0 0.0
    %143 = vmatpush1.xpose.msra.mxu0 0.0
    %144 = vmatprep.subr.mxu0 0.0
    %145 = vmatpush1.xpose.msra.mxu0 0.0
    %146 = vmatprep.subr.mxu0 0.0
    %147 = vmatpush1.xpose.msra.mxu0 0.0
    %148 = vmatprep.subr.mxu0 0.0
    %149 = vmatpush1.xpose.msra.mxu0 0.0
    %150 = vmatprep.subr.mxu0 0.0
    %151 = vmatpush1.xpose.msra.mxu0 0.0
    %152 = vmatprep.subr.mxu0 0.0
    %153 = vmatpush1.xpose.msra.mxu0 0.0
    %154 = vmatprep.subr.mxu0 0.0
    %155 = vmatpush1.xpose.msra.mxu0 0.0
    %156 = vmatprep.subr.mxu0 0.0
    %157 = vmatpush1.xpose.msra.mxu0 0.0
    %158 = vmatprep.subr.mxu0 0.0
    %159 = vmatpush1.xpose.msra.mxu0 0.0
    %160 = vmatprep.subr.mxu0 0.0
    %161 = vmatpush1.xpose.msra.mxu0 0.0
    %162 = vmatprep.subr.mxu0 0.0
    %163 = vmatpush1.xpose.msra.mxu0 0.0
    %164 = vmatprep.subr.mxu0 0.0
    %165 = vmatpush1.xpose.msra.mxu0 0.0
    %166 = vmatprep.subr.mxu0 0.0
    %167 = vmatpush1.xpose.msra.mxu0 0.0
    %168 = vmatprep.subr.mxu0 0.0
    %169 = vmatpush1.xpose.msra.mxu0 0.0
    %170 = vmatprep.subr.mxu0 0.0
    %171 = vmatpush1.xpose.msra.mxu0 0.0
    %172 = vmatprep.subr.mxu0 0.0
    %173 = vmatpush1.xpose.msra.mxu0 0.0
    %174 = vmatprep.mubr.f32.mxu0 0.0
    %175 = vmatmul.mubr.f32.gmra.mrb[0].mxu0 %v106
    %v176 = vpop.f32.mrb[0].mxu0
    %v177 = vadd.f32 0.0, %v176
    %v178 = vpop.f32.mrb[0].mxu0
    %179 = vmatprep.mubr.f32.mxu0 0.0
    %180 = vmatmul.mubr.f32.gmra.mrb[0].mxu0 %v107
    %v181 = vpop.f32.mrb[0].mxu0
    %v182 = vadd.f32 0.0, %v181
    %v183 = vpop.f32.mrb[0].mxu0
    %184 = vdwg.mxu0
    %v185 = vld [vmem:[%s96] sm:$0xff]
    %v186 = vld [vmem:[%s96 + $0x8] sm:$0xff]
    %v187 = vld [vmem:[%s102] sm:$0x1]
    %189 = vset.pattern.permute.xlu0 0
    %190 = vperm.xlu0 %189, %v185
    %v191 = vpop.permute.xlu0 %190
    %194 = vset.pattern.permute.xlu0 0
    %195 = vperm.xlu0 %194, %v186
    %v196 = vpop.permute.xlu0 %195
    %v199 = vlaneseq
    %v200 = vshrl.u32 %v199, 7
    %v201 = vsub.s32 0, %v200
    %v202 = vrot.slane %v187, %v201
    %v204 = vadd.f32 %v191, %v202
    %v205 = vadd.f32 %v196, %v202
    %v206 = vmul.f32 %v177, 2.0
    %v207 = vmul.f32 %v182, 2.0
    %v208 = vsub.f32 %v204, %v206
    %v209 = vsub.f32 %v205, %v207
    %s210 = sld [smem:[#allocation5]]
    %s211 = smul.f32 %s210, -0.25
    %v212 = vstv %s211
    %v213 = vmul.f32 %v208, %v212
    %v214 = vmul.f32 %v209, %v212
    %v215 = vmin.f32 %v213, 0.0
    %v216 = vmin.f32 %v214, 0.0
    %v217 = vmul.f32 %v215, 1.442695
    %v218 = vpow.pop %v217
    %v219 = vmul.f32 %v216, 1.442695
    %v220 = vpow.pop %v219
    %v221 = vmul.f32 %v218, %v218
    %v222 = vmul.f32 %v220, %v220
    %v223 = vadd.f32 %v218, %v221
    %v224 = vadd.f32 %v220, %v222
    %v225 = vmul.f32 %v221, %v221
    %v226 = vmul.f32 %v222, %v222
    %v227 = vadd.f32 %v223, %v225
    %v228 = vadd.f32 %v224, %v226
    %v229 = vmul.f32 %v225, %v225
    %v230 = vmul.f32 %v226, %v226
    %v231 = vadd.f32 %v227, %v229
    %v232 = vadd.f32 %v228, %v230
    %v233 = vmul.f32 %v229, %v229
    %v234 = vmul.f32 %v230, %v230
    %v235 = vadd.f32 %v231, %v233
    %v236 = vadd.f32 %v232, %v234
    %v237 = vlaneseq
    %v238 = vshrl.u32 %v237, 7
    %v239 = vadd.s32 %v238, 8
    %s240 = smul.u32 %s104, 16
    %v241 = vstv %s240
    %v242 = vadd.s32 %v238, %v241
    %v243 = vadd.s32 %v239, %v241
    %v244 = vlaneseq
    %v245 = vand.u32 %v244, 127
    %s246 = smul.u32 %s105, 16
    %v247 = vstv %s246
    %v248 = vadd.s32 %v245, %v247
    %vm249 = vcmp.lt.s32.totalorder %v242, 8
    %vm250 = vcmp.lt.s32.totalorder %v243, 8
    %v251 = vsel %vm249, 1, 0
    %v252 = vsel %vm250, 1, 0
    %v253 = vcvt.s32.f32 %v251
    %v254 = vcvt.s32.f32 %v252
    %vm255 = vcmp.ge.s32.totalorder %v242, 8
    %vm256 = vcmp.ge.s32.totalorder %v243, 8
    %vm257 = vcmp.lt.s32.totalorder %v242, 16
    %vm258 = vcmp.lt.s32.totalorder %v243, 16
    %vm259 = vmand %vm255, %vm257
    %vm260 = vmand %vm256, %vm258
    %v261 = vsel %vm259, 1, 0
    %v262 = vsel %vm260, 1, 0
    %v263 = vcvt.s32.f32 %v261
    %v264 = vcvt.s32.f32 %v262
    %vm265 = vcmp.lt.s32.totalorder %v248, 8
    %v266 = vsel %vm265, 1, 0
    %v267 = vcvt.s32.f32 %v266
    %vm268 = vcmp.ge.s32.totalorder %v248, 8
    %vm269 = vcmp.lt.s32.totalorder %v248, 16
    %vm270 = vmand %vm268, %vm269
    %v271 = vsel %vm270, 1, 0
    %v272 = vcvt.s32.f32 %v271
    %v273 = vmul.f32 %v235, %v267
    %v274 = vmul.f32 %v236, %v267
    %vm275 = vcmask 130048
    %v276 = vsel %vm275, %v273, 0.0
    %277 = vadd.xlane.f32.xlu0 %v276
    %v278 = vpop.xlane.xlu0 %277
    %v279 = vsel %vm275, %v274, 0.0
    %280 = vadd.xlane.f32.xlu0 %v279
    %v281 = vpop.xlane.xlu0 %280
    %v282 = vmul.f32 %v235, %v272
    %v283 = vmul.f32 %v236, %v272
    %v284 = vsel %vm275, %v282, 0.0
    %285 = vadd.xlane.f32.xlu0 %v284
    %v286 = vpop.xlane.xlu0 %285
    %v287 = vsel %vm275, %v283, 0.0
    %288 = vadd.xlane.f32.xlu0 %v287
    %v289 = vpop.xlane.xlu0 %288
    %v290 = vmul.f32 %v278, %v253
    %v291 = vmul.f32 %v281, %v254
    %vm292 = vcmask 7168
    %v293 = vsel %vm292, %v290, 0.0
    %v294 = vsel %vm292, %v291, 0.0
    %v295 = vadd.f32 %v293, %v294
    %296 = vadd.xlane.f32.xlu0 %v295
    %v297 = vpop.xlane.xlu0 %296
    %v298 = vrot.slane %v297, 4
    %v299 = vadd.f32 %v297, %v298
    %v300 = vrot.slane %v299, 2
    %v301 = vadd.f32 %v299, %v300
    %v302 = vrot.slane %v301, 1
    %v303 = vadd.f32 %v301, %v302
    %s304 = vtos %v303
    %v305 = vmul.f32 %v286, %v253
    %v306 = vmul.f32 %v289, %v254
    %v307 = vsel %vm292, %v305, 0.0
    %v308 = vsel %vm292, %v306, 0.0
    %v309 = vadd.f32 %v307, %v308
    %310 = vadd.xlane.f32.xlu0 %v309
    %v311 = vpop.xlane.xlu0 %310
    %v312 = vrot.slane %v311, 4
    %v313 = vadd.f32 %v311, %v312
    %v314 = vrot.slane %v313, 2
    %v315 = vadd.f32 %v313, %v314
    %v316 = vrot.slane %v315, 1
    %v317 = vadd.f32 %v315, %v316
    %s318 = vtos %v317
    %v319 = vmul.f32 %v278, %v263
    %v320 = vmul.f32 %v281, %v264
    %v321 = vsel %vm292, %v319, 0.0
    %v322 = vsel %vm292, %v320, 0.0
    %v323 = vadd.f32 %v321, %v322
    %324 = vadd.xlane.f32.xlu0 %v323
    %v325 = vpop.xlane.xlu0 %324
    %v326 = vrot.slane %v325, 4
    %v327 = vadd.f32 %v325, %v326
    %v328 = vrot.slane %v327, 2
    %v329 = vadd.f32 %v327, %v328
    %v330 = vrot.slane %v329, 1
    %v331 = vadd.f32 %v329, %v330
    %s332 = vtos %v331
    %v333 = vmul.f32 %v286, %v263
    %v334 = vmul.f32 %v289, %v264
    %v335 = vsel %vm292, %v333, 0.0
    %v336 = vsel %vm292, %v334, 0.0
    %v337 = vadd.f32 %v335, %v336
    %338 = vadd.xlane.f32.xlu0 %v337
    %v339 = vpop.xlane.xlu0 %338
    %v340 = vrot.slane %v339, 4
    %v341 = vadd.f32 %v339, %v340
    %v342 = vrot.slane %v341, 2
    %v343 = vadd.f32 %v341, %v342
    %v344 = vrot.slane %v343, 1
    %v345 = vadd.f32 %v343, %v344
    %s346 = vtos %v345
    %p347 = scmp.eq.s32.totalorder %s104, %s105
    %s348 = scalar_select %p347, 1.0, 2.0
    %s349 = smul.f32 %s348, %s304
    %s350 = smul.f32 %s349, 0.015625
    %s351 = smul.f32 %s348, %s346
    %s352 = smul.f32 %s351, 0.015625
    %s353 = sadd.f32 %s318, %s332
    %s354 = scalar_select %p347, %s318, %s353
    %s355 = smul.f32 %s354, 0.015625
    %vm356 = vcmp.eq.s32.totalorder %v245, 0
    %v357 = vstv %s350
    %v358 = vsel %vm356, %v357, 0.0
    %vm359 = vcmp.eq.s32.totalorder %v245, 1
    %v360 = vstv %s355
    %v361 = vsel %vm359, %v360, 0.0
    %v362 = vadd.f32 %v358, %v361
    %vm363 = vcmp.eq.s32.totalorder %v245, 2
    %v364 = vstv %s352
    %v365 = vsel %vm363, %v364, 0.0
    %v366 = vadd.f32 %v362, %v365
    %367 = vst [vmem:[#allocation6] sm:$0xff] %v366
    // Predicated region
    $region18: #{tpu_custom_call.1} parent=1 // pred_check
      _
    $region19: #{tpu_custom_call.1} parent=1 // pred_check_branch
      %369 = sbr.rel (0) target = $region21
    $region20: #{tpu_custom_call.1} parent=1 // pred_region
      %s371 = ssub.s32 128, 128
      %372 = vsyncadd [#allocation7], %s371
      %s374 = sshll.u32 [#allocation6], 4
      %s375 = int_to_ptr.vmem [resolvable:$true] %s374
      %377 = dma.vmem_to_hbm [thread:$0]  %s375, 128, %s7, [#allocation7]
    $region21: #{tpu_custom_call.1} parent=1 // pred_fallthru
      _
    // Predicated region
    $region22: #{tpu_custom_call.1} parent=1 // pred_check
      _
    $region23: #{tpu_custom_call.1} parent=1 // pred_check_branch
      %379 = sbr.rel (0) target = $region25
    $region24: #{tpu_custom_call.1} parent=1 // pred_region
      %380 = dma.done [#allocation7], 128
    $region25: #{tpu_custom_call.1} parent=1 // pred_fallthru
      _
    %381 = vsyncpa [#allocation7], 1

</llo_original>
